<compile_context>
chip_gen: v7x
topology: tpu7x:2x2x1
jax: 0.10.0
libtpu: 0.0.40
codegen_flags: <defaults>
</compile_context>

<pallas_src>
import functools

import jax
import jax.numpy as jnp
from jax import lax
from jax.experimental import pallas as pl
from jax.experimental.pallas import tpu as pltpu

EPS = 1e-5  # torch.nn.BatchNorm1d default eps


def _round_up(n, m):
    return ((n + m - 1) // m) * m


def down_layer_kernel(x_ref, w_ref, gamma_ref, beta_ref, o_ref, *, b_real, b_pad):
    # x:     (Bp, D)  bf16, full array, un-pipelined VMEM operand (constant across grid)
    # w:     (D, tn)  bf16 weight tile, pre-transposed (K on sublanes, N on lanes)
    # gamma: (1, tn)  BatchNorm1d weight tile
    # beta:  (1, tn)  BatchNorm1d bias tile
    # o:     (Bp, tn) output tile
    x = x_ref[...]
    w = w_ref[...]

    # Linear (bias dropped: exactly cancelled by the BN batch-mean subtraction; this also
    # makes the zero-padded batch rows contribute exactly 0 to the column sums).
    y = jnp.dot(x, w, preferred_element_type=jnp.float32)  # (Bp, tn) f32, MXU f32 acc

    inv_b = 1.0 / b_real                                    # real batch size (static)
    mean = jnp.sum(y, axis=0, keepdims=True) * inv_b        # pad rows are 0 -> sum exact
    yc = y - mean
    if b_pad != b_real:                                     # static: mask pad rows out of var
        rows = lax.broadcasted_iota(jnp.int32, yc.shape, 0)
        yc = jnp.where(rows < b_real, yc, 0.0)

    # Two-pass variance (numerically safer than E[y^2] - E[y]^2).
    var = jnp.sum(yc * yc, axis=0, keepdims=True) * inv_b   # biased (torch training mode)
    s = gamma_ref[...] * lax.rsqrt(var + EPS)               # (1, tn)

    # Normalize + affine as a single FMA, then ReLU.
    o_ref[...] = jnp.maximum(yc * s + beta_ref[...], 0.0).astype(o_ref.dtype)


def _vmem_budget_bytes():
    # Leave headroom below physical VMEM: v7x has 64 MiB/TC, v5e/v6e have 128 MiB.
    try:
        kind = jax.devices()[0].device_kind.lower()
    except Exception:
        kind = ""
    if any(t in kind for t in ("v2", "v3", "v4", "v5", "v6")):
        return 96 * 1024 * 1024
    return 48 * 1024 * 1024  # v7x / unknown: conservative


def _per_step_vmem(b_pad, d, tn, out_bytes, n_wbuf):
    x_b = b_pad * d * 2                # bf16 x, single resident copy
    w_b = n_wbuf * d * tn * 2          # bf16 weight tiles (pipelined)
    o_b = 2 * b_pad * tn * out_bytes   # double-buffered output tiles
    p_b = 2 * 2 * tn * 4               # gamma + beta, double-buffered
    return x_b + w_b + o_b + p_b


def _pick_tn(h_pad, d, b_pad, out_bytes, budget):
    for tn in (1024, 512, 256, 128):
        if h_pad % tn == 0 and _per_step_vmem(b_pad, d, tn, out_bytes, 2) <= 0.8 * budget:
            return tn
    return 128


def prepare_down_layer_params(w, b, gamma, beta):
    """One-time parameter prep (hoisted out of the per-call hot path).

    w: (H, D) Linear weight; b: (H,) Linear bias; gamma/beta: (H,) BN affine.
    The weight is transposed to (D, H), cast to bf16, and H is padded to a multiple of 128
    so output stores stay lane-dense. The Linear bias is exactly cancelled by training-mode
    BatchNorm's batch-mean subtraction, so it is dropped.
    """
    h, d = w.shape
    del b  # cancelled by BN mean subtraction — provably dead work for the forward pass
    h_pad = _round_up(h, 128)
    w_t = jnp.zeros((d, h_pad), jnp.bfloat16).at[:, :h].set(w.T.astype(jnp.bfloat16))
    g = jnp.ones((1, h_pad), jnp.float32).at[:, :h].set(gamma.astype(jnp.float32).reshape(1, h))
    be = jnp.zeros((1, h_pad), jnp.float32).at[:, :h].set(beta.astype(jnp.float32).reshape(1, h))
    return {"w_t": w_t, "gamma": g, "beta": be, "out_features": h}


def down_layer(x, params, out_dtype=None):
    """x: (B, D); params from prepare_down_layer_params. Returns (B, H) in out_dtype (default x.dtype)."""
    b_real, d = x.shape
    w_t, gamma, beta = params["w_t"], params["gamma"], params["beta"]
    h = params["out_features"]
    h_pad = w_t.shape[1]
    assert w_t.shape[0] == d
    out_dtype = x.dtype if out_dtype is None else out_dtype
    out_bytes = jnp.dtype(out_dtype).itemsize

    # Pad batch to a multiple of 16 (bf16 sublane packing). Zero rows + bias elision keep
    # the BN column sums exact; the kernel divides by the real B.
    b_pad = _round_up(max(b_real, 16), 16)
    x_bf = x.astype(jnp.bfloat16)
    if b_pad != b_real:
        x_bf = jnp.zeros((b_pad, d), jnp.bfloat16).at[:b_real, :].set(x_bf)

    budget = _vmem_budget_bytes()
    tn = _pick_tn(h_pad, d, b_pad, out_bytes, budget)
    n_steps = h_pad // tn

    # Weight stream dominates HBM traffic for small/medium B: deepen its pipeline if it fits.
    w_spec_kwargs = {}
    if n_steps >= 3 and _per_step_vmem(b_pad, d, tn, out_bytes, 3) <= 0.8 * budget:
        w_spec_kwargs["pipeline_mode"] = pl.Buffered(3)

    kernel = functools.partial(down_layer_kernel, b_real=b_real, b_pad=b_pad)

    out = pl.pallas_call(
        kernel,
        out_shape=jax.ShapeDtypeStruct((b_pad, h_pad), out_dtype),
        grid_spec=pltpu.PrefetchScalarGridSpec(
            num_scalar_prefetch=0,
            grid=(n_steps,),
            in_specs=[
                # x: constant across the grid -> full-array, un-pipelined VMEM operand
                # (single resident copy instead of a wasted double buffer).
                pl.BlockSpec(memory_space=pltpu.MemorySpace.VMEM),
                pl.BlockSpec((d, tn), lambda j: (0, j), **w_spec_kwargs),  # weight streams over H
                pl.BlockSpec((1, tn), lambda j: (0, j)),                   # gamma tile
                pl.BlockSpec((1, tn), lambda j: (0, j)),                   # beta tile
            ],
            out_specs=pl.BlockSpec((b_pad, tn), lambda j: (0, j)),
        ),
        compiler_params=pltpu.CompilerParams(
            dimension_semantics=("parallel",),  # BN is per-feature: H tiles independent
            vmem_limit_bytes=budget,
        ),
    )(x_bf, w_t, gamma, beta)

    return out[:b_real, :h]


if __name__ == "__main__":
    B, D = 8, 32
    H = D // 2

    key = jax.random.PRNGKey(0)
    kx, kw, kb = jax.random.split(key, 3)

    x = jax.random.normal(kx, (B, D), dtype=jnp.float32)
    # Deterministic synthetic parameters (PyTorch-like scale for Linear init).
    bound = 1.0 / jnp.sqrt(D)
    w = jax.random.uniform(kw, (H, D), dtype=jnp.float32, minval=-bound, maxval=bound)
    b = jax.random.uniform(kb, (H,), dtype=jnp.float32, minval=-bound, maxval=bound)
    gamma = jnp.ones((H,), dtype=jnp.float32)   # fresh BatchNorm1d weight
    beta = jnp.zeros((H,), dtype=jnp.float32)   # fresh BatchNorm1d bias

    params = prepare_down_layer_params(w, b, gamma, beta)
    out = down_layer(x, params)
    jax.block_until_ready(out)

    # Pure-JAX reference (training-mode batch norm). The reference INCLUDES the Linear
    # bias to demonstrate it cancels; matmul operands are routed through bf16 to match
    # the kernel's precision choice.
    x32 = x.astype(jnp.bfloat16).astype(jnp.float32)
    w32 = w.astype(jnp.bfloat16).astype(jnp.float32)
    y_ref = x32 @ w32.T + b
    m = y_ref.mean(0, keepdims=True)
    v = ((y_ref - m) ** 2).mean(0, keepdims=True)
    ref = jnp.maximum(gamma * (y_ref - m) / jnp.sqrt(v + EPS) + beta, 0.0)

    assert out.shape == (B, H)
    assert jnp.allclose(out, ref, atol=1e-4, rtol=1e-4), "mismatch vs reference"
    print("KERNEL_OK")
</pallas_src>

<mosaic_0001>
module attributes {stable_mosaic.version = 11 : i64} {
  func.func @down_layer_kernel(%arg0: i32, %arg1: memref<16x32xbf16, #tpu.memory_space<vmem>>, %arg2: memref<32x128xbf16, #tpu.memory_space<vmem>>, %arg3: memref<1x128xf32, #tpu.memory_space<vmem>>, %arg4: memref<1x128xf32, #tpu.memory_space<vmem>>, %arg5: memref<16x128xf32, #tpu.memory_space<vmem>>) attributes {dimension_semantics = [#tpu.dimension_semantics<parallel>], iteration_bounds = array<i64: 1>, scalar_prefetch = 0 : i64, scratch_operands = 0 : i64, tpu.core_type = #tpu.core_type<tc>, window_params = [{pipeline_mode = #tpu.pipeline_mode<synchronous>, transform_indices = @transform_0, window_bounds = array<i64: 16, 32>}, {transform_indices = @transform_1, window_bounds = array<i64: 32, 128>}, {transform_indices = @transform_2, window_bounds = array<i64: 1, 128>}, {transform_indices = @transform_3, window_bounds = array<i64: 1, 128>}, {transform_indices = @transform_4, window_bounds = array<i64: 16, 128>}]} {
    %c0 = arith.constant 0 : index
    %c0_0 = arith.constant 0 : index
    %0 = vector.load %arg1[%c0, %c0_0] : memref<16x32xbf16, #tpu.memory_space<vmem>>, vector<16x32xbf16>
    %c0_1 = arith.constant 0 : index
    %c0_2 = arith.constant 0 : index
    %1 = vector.load %arg2[%c0_1, %c0_2] : memref<32x128xbf16, #tpu.memory_space<vmem>>, vector<32x128xbf16>
    %cst = arith.constant dense<0.000000e+00> : vector<16x128xf32>
    %2 = tpu.matmul %0, %1, %cst {dimension_numbers = #tpu.dot_dimension_numbers<[1], [0], [0], [1], [0, 0, 1, 1], [], []>} : vector<16x32xbf16>, vector<32x128xbf16>, vector<16x128xf32> -> vector<16x128xf32>
    %cst_3 = arith.constant dense<0.000000e+00> : vector<128xf32>
    %3 = vector.multi_reduction <add>, %2, %cst_3 [0] : vector<16x128xf32> to vector<128xf32>
    %4 = vector.shape_cast %3 : vector<128xf32> to vector<1x128xf32>
    %cst_4 = arith.constant 1.250000e-01 : f32
    %5 = vector.broadcast %cst_4 : f32 to vector<1x128xf32>
    %6 = arith.mulf %4, %5 : vector<1x128xf32>
    %7 = vector.broadcast %6 : vector<1x128xf32> to vector<16x128xf32>
    %8 = arith.subf %2, %7 : vector<16x128xf32>
    %9 = tpu.iota {dimensions = array<i32: 0>} : vector<16x128xi32>
    %c8_i32 = arith.constant 8 : i32
    %10 = vector.broadcast %c8_i32 : i32 to vector<16x128xi32>
    %11 = arith.cmpi slt, %9, %10 : vector<16x128xi32>
    %cst_5 = arith.constant 0.000000e+00 : f32
    %12 = vector.broadcast %cst_5 : f32 to vector<16x128xf32>
    %13 = arith.select %11, %8, %12 : vector<16x128xi1>, vector<16x128xf32>
    %14 = arith.mulf %13, %13 : vector<16x128xf32>
    %cst_6 = arith.constant dense<0.000000e+00> : vector<128xf32>
    %15 = vector.multi_reduction <add>, %14, %cst_6 [0] : vector<16x128xf32> to vector<128xf32>
    %16 = vector.shape_cast %15 : vector<128xf32> to vector<1x128xf32>
    %cst_7 = arith.constant 1.250000e-01 : f32
    %17 = vector.broadcast %cst_7 : f32 to vector<1x128xf32>
    %18 = arith.mulf %16, %17 : vector<1x128xf32>
    %c0_8 = arith.constant 0 : index
    %c0_9 = arith.constant 0 : index
    %19 = vector.load %arg3[%c0_8, %c0_9] : memref<1x128xf32, #tpu.memory_space<vmem>>, vector<1x128xf32>
    %cst_10 = arith.constant 9.99999974E-6 : f32
    %20 = vector.broadcast %cst_10 : f32 to vector<1x128xf32>
    %21 = arith.addf %18, %20 : vector<1x128xf32>
    %22 = math.rsqrt %21 : vector<1x128xf32>
    %23 = arith.mulf %19, %22 : vector<1x128xf32>
    %24 = vector.broadcast %23 : vector<1x128xf32> to vector<16x128xf32>
    %25 = arith.mulf %13, %24 : vector<16x128xf32>
    %c0_11 = arith.constant 0 : index
    %c0_12 = arith.constant 0 : index
    %26 = vector.load %arg4[%c0_11, %c0_12] : memref<1x128xf32, #tpu.memory_space<vmem>>, vector<1x128xf32>
    %27 = vector.broadcast %26 : vector<1x128xf32> to vector<16x128xf32>
    %28 = arith.addf %25, %27 : vector<16x128xf32>
    %cst_13 = arith.constant 0.000000e+00 : f32
    %29 = vector.broadcast %cst_13 : f32 to vector<16x128xf32>
    %30 = arith.maximumf %28, %29 : vector<16x128xf32>
    %c0_14 = arith.constant 0 : index
    %c0_15 = arith.constant 0 : index
    %31 = vector.load %arg5[%c0_14, %c0_15] : memref<16x128xf32, #tpu.memory_space<vmem>>, vector<16x128xf32>
    tpu.vector_store %arg5[%c0_14, %c0_15], %30 {strides = array<i32>} : memref<16x128xf32, #tpu.memory_space<vmem>>, vector<16x128xf32>,
    return
  }
  func.func @transform_0(%arg0: i32) -> (i32, i32) {
    %c0_i32 = arith.constant 0 : i32
    %c0_i32_0 = arith.constant 0 : i32
    %c0_i32_1 = arith.constant 0 : i32
    return %c0_i32, %c0_i32_0 : i32, i32
  }
  func.func @transform_1(%arg0: i32) -> (i32, i32) {
    %c0_i32 = arith.constant 0 : i32
    %c0_i32_0 = arith.constant 0 : i32
    return %c0_i32, %arg0 : i32, i32
  }
  func.func @transform_2(%arg0: i32) -> (i32, i32) {
    %c0_i32 = arith.constant 0 : i32
    %c0_i32_0 = arith.constant 0 : i32
    return %c0_i32, %arg0 : i32, i32
  }
  func.func @transform_3(%arg0: i32) -> (i32, i32) {
    %c0_i32 = arith.constant 0 : i32
    %c0_i32_0 = arith.constant 0 : i32
    return %c0_i32, %arg0 : i32, i32
  }
  func.func @transform_4(%arg0: i32) -> (i32, i32) {
    %c0_i32 = arith.constant 0 : i32
    %c0_i32_0 = arith.constant 0 : i32
    return %c0_i32, %arg0 : i32, i32
  }
}

</mosaic_0001>

<llo_original>
// kernel: tpu_custom_call.1
$region0: #{tpu_custom_call.1}
  #allocation0 [shape = 'u32[]', space=smem, size = 0x4, offset = 0x4, fixed_abs, tag = 'smem constant byte address 0x4 - core index']
  #allocation1 [shape = 'u32[144,128]{1,0:T(1,128)}', space=vmem, size = 0x12000, scoped, tag = 'internal scratch']
  %s0 = inlined_call_operand.hbm [shape: bf16[16,32], index: 0, kind: input, shape index: {}]
  %s1 = inlined_call_operand.hbm [shape: bf16[32,128], index: 1, kind: input, shape index: {}]
  %s2 = inlined_call_operand.vmem [shape: f32[1,128], index: 2, kind: input, shape index: {}]
  %s3 = inlined_call_operand.vmem [shape: f32[1,128], index: 3, kind: input, shape index: {}]
  %s4 = inlined_call_operand.hbm [shape: f32[16,128], index: 4, kind: output, shape index: {}]
  %s5 = sld [smem:[#allocation0]]
  $region34: #{tpu_custom_call.1} parent=0
    _
  %s7 = ssub.s32 1, %s5
  %s8 = scalar_select 0, %s7, %s5
  $region1: #{tpu_custom_call.1} parent=0
    #allocation2 [shape = 'u8[4096]{0}', space=vmem, size = 0x1000, scoped, tag = 'input window, operand 0, single buffered']
    #allocation3 [shape = 's32[1]{0}', space=sflag, size = 0x4, scoped, tag = 'scoped memory for tpu_custom_call.1']
    #allocation4 [shape = 's32[1]{0}', space=sflag, size = 0x4, scoped, tag = 'scoped memory for tpu_custom_call.1']
    #allocation5 [shape = 'u8[8192]{0}', space=vmem, size = 0x2000, scoped, tag = 'input window, operand 1, single buffered']
    #allocation6 [shape = 's32[1]{0}', space=sflag, size = 0x4, scoped, tag = 'scoped memory for tpu_custom_call.1']
    #allocation7 [shape = 'u8[8192]{0}', space=vmem, size = 0x2000, scoped, tag = 'output window, operand 0, single buffered']
    %9 = vsyncpa [#allocation3], 0
    %10 = vsyncpa [#allocation6], 0
    %11 = vsyncpa [#allocation4], 0
    // Predicated region
    $region2: #{tpu_custom_call.1} parent=1 // pred_check
      _
    $region3: #{tpu_custom_call.1} parent=1 // pred_check_branch
      %13 = sbr.rel (0) target = $region5
    $region4: #{tpu_custom_call.1} parent=1 // pred_region
      %s15 = ssub.s32 128, 128
      %16 = vsyncadd [#allocation3], %s15
      %s17 = sshll.u32 [#allocation2], 4
      %s18 = int_to_ptr.vmem [resolvable:$true] %s17
      %23 = dma.hbm_to_vmem [thread:$0]  %s0, 128, %s18, [#allocation3], 64, 64, 4
    $region5: #{tpu_custom_call.1} parent=1 // pred_fallthru
      _
    // Predicated region
    $region6: #{tpu_custom_call.1} parent=1 // pred_check
      _
    $region7: #{tpu_custom_call.1} parent=1 // pred_check_branch
      %25 = sbr.rel (0) target = $region9
    $region8: #{tpu_custom_call.1} parent=1 // pred_region
      %s27 = ssub.s32 256, 256
      %28 = vsyncadd [#allocation6], %s27
      %s29 = sshll.u32 [#allocation5], 4
      %s30 = int_to_ptr.vmem [resolvable:$true] %s29
      %35 = dma.hbm_to_vmem [thread:$0]  %s1, 256, %s30, [#allocation6], 64, 64, 4
    $region9: #{tpu_custom_call.1} parent=1 // pred_fallthru
      _
    // Predicated region
    $region10: #{tpu_custom_call.1} parent=1 // pred_check
      _
    $region11: #{tpu_custom_call.1} parent=1 // pred_check_branch
      %37 = sbr.rel (0) target = $region13
    $region12: #{tpu_custom_call.1} parent=1 // pred_region
      _
    $region13: #{tpu_custom_call.1} parent=1 // pred_fallthru
      _
    // Predicated region
    $region14: #{tpu_custom_call.1} parent=1 // pred_check
      _
    $region15: #{tpu_custom_call.1} parent=1 // pred_check_branch
      %39 = sbr.rel (0) target = $region17
    $region16: #{tpu_custom_call.1} parent=1 // pred_region
      _
    $region17: #{tpu_custom_call.1} parent=1 // pred_fallthru
      _
    // Predicated region
    $region18: #{tpu_custom_call.1} parent=1 // pred_check
      _
    $region19: #{tpu_custom_call.1} parent=1 // pred_check_branch
      %41 = sbr.rel (0) target = $region21
    $region20: #{tpu_custom_call.1} parent=1 // pred_region
      %42 = dma.done [#allocation3], 128
    $region21: #{tpu_custom_call.1} parent=1 // pred_fallthru
      _
    // Predicated region
    $region22: #{tpu_custom_call.1} parent=1 // pred_check
      _
    $region23: #{tpu_custom_call.1} parent=1 // pred_check_branch
      %44 = sbr.rel (0) target = $region25
    $region24: #{tpu_custom_call.1} parent=1 // pred_region
      %45 = dma.done [#allocation6], 256
    $region25: #{tpu_custom_call.1} parent=1 // pred_fallthru
      _
    %v47 = vld [vmem:[#allocation2] sm:$0xf]
    %v48 = vld [vmem:[#allocation2 + $0x4] sm:$0xf]
    %v49 = vld [vmem:[#allocation5] sm:$0xf]
    %v50 = vld [vmem:[#allocation5 + $0x4] sm:$0xf]
    %v51 = vld [vmem:[#allocation5 + $0x8] sm:$0xf]
    %v52 = vld [vmem:[#allocation5 + $0xc] sm:$0xf]
    %v55 = vunpack.c.l.b16 %v47
    %v56 = vunpack.c.l.b16 %v48
    %v57 = vpack.c.b16 %v56, %v55
    %v62 = vunpack.c.l.b16 %v49
    %v63 = vunpack.c.l.b16 %v50
    %v64 = vunpack.c.l.b16 %v51
    %v65 = vunpack.c.l.b16 %v52
    %v66 = vpack.c.b16 %v63, %v62
    %v67 = vpack.c.b16 %v65, %v64
    %vm70 = vcmask 261120
    %v72 = vsel %vm70, %v57, 0
    %74 = vmatprep.subr.bf16.mxu0 0
    %75 = vmatpush1.bf16.msra.mxu0 %v66
    %76 = vmatprep.subr.bf16.mxu0 0
    %77 = vmatpush1.bf16.msra.mxu0 %v67
    %78 = vmatprep.subr.bf16.mxu0 0
    %79 = vmatpush1.bf16.msra.mxu0 0
    %80 = vmatprep.subr.bf16.mxu0 0
    %81 = vmatpush1.bf16.msra.mxu0 0
    %82 = vmatprep.subr.bf16.mxu0 0
    %83 = vmatpush1.bf16.msra.mxu0 0
    %84 = vmatprep.subr.bf16.mxu0 0
    %85 = vmatpush1.bf16.msra.mxu0 0
    %86 = vmatprep.subr.bf16.mxu0 0
    %87 = vmatpush1.bf16.msra.mxu0 0
    %88 = vmatprep.subr.bf16.mxu0 0
    %89 = vmatpush1.bf16.msra.mxu0 0
    %90 = vmatprep.subr.bf16.mxu0 0
    %91 = vmatpush1.bf16.msra.mxu0 0
    %92 = vmatprep.subr.bf16.mxu0 0
    %93 = vmatpush1.bf16.msra.mxu0 0
    %94 = vmatprep.subr.bf16.mxu0 0
    %95 = vmatpush1.bf16.msra.mxu0 0
    %96 = vmatprep.subr.bf16.mxu0 0
    %97 = vmatpush1.bf16.msra.mxu0 0
    %98 = vmatprep.subr.bf16.mxu0 0
    %99 = vmatpush1.bf16.msra.mxu0 0
    %100 = vmatprep.subr.bf16.mxu0 0
    %101 = vmatpush1.bf16.msra.mxu0 0
    %102 = vmatprep.subr.bf16.mxu0 0
    %103 = vmatpush1.bf16.msra.mxu0 0
    %104 = vmatprep.subr.bf16.mxu0 0
    %105 = vmatpush1.bf16.msra.mxu0 0
    %106 = vmatprep.mubr.bf16.mxu0 0
    %107 = vmatmul.mubr.bf16.gmra.mrb[0].mxu0 %v72
    %v108 = vpop.f32.mrb[0].mxu0
    %v109 = vadd.f32 0.0, %v108
    %v110 = vpop.f32.mrb[0].mxu0
    %v111 = vpop.f32.mrb[0].mxu0
    %v112 = vadd.f32 0.0, %v111
    %v113 = vpop.f32.mrb[0].mxu0
    %114 = vdwg.mxu0
    %v115 = vadd.f32 %v109, %v112
    %v116 = vrot.slane %v115, 4
    %v117 = vadd.f32 %v115, %v116
    %v118 = vrot.slane %v117, 2
    %v119 = vadd.f32 %v117, %v118
    %v120 = vrot.slane %v119, 1
    %v121 = vadd.f32 %v119, %v120
    %v122 = vmul.f32 %v121, 0.125
    %v123 = vsub.f32 %v109, %v122
    %v124 = vsub.f32 %v112, %v122
    %v125 = vlaneseq
    %v126 = vshrl.u32 %v125, 7
    %v127 = vadd.s32 %v126, 8
    %vm128 = vcmp.lt.s32.totalorder %v126, 8
    %vm129 = vcmp.lt.s32.totalorder %v127, 8
    %v130 = vsel %vm128, %v123, 0.0
    %v131 = vsel %vm129, %v124, 0.0
    %v132 = vmul.f32 %v130, %v130
    %v133 = vmul.f32 %v131, %v131
    %v134 = vadd.f32 %v132, %v133
    %v135 = vrot.slane %v134, 4
    %v136 = vadd.f32 %v134, %v135
    %v137 = vrot.slane %v136, 2
    %v138 = vadd.f32 %v136, %v137
    %v139 = vrot.slane %v138, 1
    %v140 = vadd.f32 %v138, %v139
    %v141 = vmul.f32 %v140, 0.125
    %v142 = vld [vmem:[%s2] sm:$0x1]
    %v143 = vadd.f32 %v141, 1e-05
    %v144 = vrsqrt.pop %v143
    %v145 = vmul.f32 %v142, %v144
    %v147 = vlaneseq
    %v148 = vshrl.u32 %v147, 7
    %v149 = vsub.s32 0, %v148
    %v150 = vrot.slane %v145, %v149
    %v152 = vmul.f32 %v130, %v150
    %v153 = vmul.f32 %v131, %v150
    %v154 = vld [vmem:[%s3] sm:$0x1]
    %v156 = vlaneseq
    %v157 = vshrl.u32 %v156, 7
    %v158 = vsub.s32 0, %v157
    %v159 = vrot.slane %v154, %v158
    %v161 = vadd.f32 %v152, %v159
    %v162 = vadd.f32 %v153, %v159
    %v163 = vmax.f32 %v161, 0.0
    %v164 = vmax.f32 %v162, 0.0
    %165 = vst [vmem:[#allocation7] sm:$0xff] %v163
    %166 = vst [vmem:[#allocation7 + $0x8] sm:$0xff] %v164
    // Predicated region
    $region26: #{tpu_custom_call.1} parent=1 // pred_check
      _
    $region27: #{tpu_custom_call.1} parent=1 // pred_check_branch
      %168 = sbr.rel (0) target = $region29
    $region28: #{tpu_custom_call.1} parent=1 // pred_region
      %s170 = ssub.s32 256, 256
      %171 = vsyncadd [#allocation4], %s170
      %s172 = sshll.u32 [#allocation7], 4
      %s173 = int_to_ptr.vmem [resolvable:$true] %s172
      %178 = dma.vmem_to_hbm [thread:$0]  %s173, 256, %s4, [#allocation4], 128, 128, 8
    $region29: #{tpu_custom_call.1} parent=1 // pred_fallthru
      _
    // Predicated region
    $region30: #{tpu_custom_call.1} parent=1 // pred_check
      _
    $region31: #{tpu_custom_call.1} parent=1 // pred_check_branch
      %180 = sbr.rel (0) target = $region33
    $region32: #{tpu_custom_call.1} parent=1 // pred_region
      %181 = dma.done [#allocation4], 256
    $region33: #{tpu_custom_call.1} parent=1 // pred_fallthru
      _
    %182 = vsyncpa [#allocation3], 1
    %183 = vsyncpa [#allocation6], 1
    %184 = vsyncpa [#allocation4], 1

</llo_original>
